<compile_context>
chip_gen: v7x
topology: tpu7x:2x2x1
jax: 0.10.0
libtpu: 0.0.40
codegen_flags: <defaults>
</compile_context>

<pallas_src>
import functools

import jax
import jax.numpy as jnp
from jax import lax
from jax.experimental import pallas as pl
from jax.experimental.pallas import tpu as pltpu


def _round_up(x, m):
    return ((x + m - 1) // m) * m


# ----------------------------------------------------------------------------
# Kernel 1: decoder head  --  out = [x | labels] @ W^T + b   (first_dense)
# ----------------------------------------------------------------------------
def _dense_head_kernel(x_ref, lab_ref, wxT_ref, wlT_ref, b_ref, out_ref):
    acc = jnp.dot(x_ref[...].astype(jnp.bfloat16), wxT_ref[...],
                  preferred_element_type=jnp.float32)
    acc = acc + jnp.dot(lab_ref[...].astype(jnp.bfloat16), wlT_ref[...],
                        preferred_element_type=jnp.float32)
    out_ref[...] = (acc + b_ref[...]).astype(out_ref.dtype)


def dense_head_pallas(x, labels, w, b):
    """x:(B,Dx), labels:(B,Dl), w:(Dout, Dx+Dl), b:(Dout,) -> (B, Dout).
    The torch.cat is fused away by splitting W column-wise."""
    B, Dx = x.shape
    Dout = w.shape[0]
    wT = w.T.astype(jnp.bfloat16)                  # (Din, Dout) bf16 MXU operand
    return pl.pallas_call(
        _dense_head_kernel,
        out_shape=jax.ShapeDtypeStruct((B, Dout), jnp.float32),
    )(x, labels, wT[:Dx], wT[Dx:], b[None, :])


# ----------------------------------------------------------------------------
# Kernel 2: the whole TCN (all residual blocks) fused in one pallas_call
# ----------------------------------------------------------------------------
def _tcn_fused_kernel(*refs, meta, Bg, LB, OFF, c_max):
    # refs = (x_ref, <per-block weight refs>, out_ref, buf_ref)
    x_ref = refs[0]
    out_ref = refs[-2]
    buf_ref = refs[-1]

    stage_is_bf16 = (buf_ref.dtype == jnp.bfloat16)

    # Zero the shared causal-pad region once.  It is never written afterwards
    # and the scratch persists across grid steps.
    if OFF > 0:
        @pl.when(pl.program_id(0) == 0)
        def _init():
            buf_ref[:, 0:OFF] = jnp.zeros((c_max, OFF), buf_ref.dtype)

    def _tap(w_ref, t, win, dB):
        v = win[:, t * dB:t * dB + LB]
        if not stage_is_bf16:
            v = v.astype(jnp.bfloat16)
        return jnp.dot(w_ref[t], v, preferred_element_type=jnp.float32)

    a = x_ref[0]                                   # (C_in0, LB) f32 activation
    widx = 1
    for blk in meta:
        K, d = blk["K"], blk["d"]
        c_in, c_out = blk["c_in"], blk["c_out"]
        dB = d * Bg                                # column shift per dilation step
        padB = (K - 1) * dB                        # causal left pad (columns)

        w1_ref, b1_ref = refs[widx], refs[widx + 1]
        w2_ref, b2_ref = refs[widx + 2], refs[widx + 3]
        widx += 4
        if blk["has_ds"]:
            wd_ref, bd_ref = refs[widx], refs[widx + 1]
            widx += 2

        # ---- conv1: causal dilated conv + ReLU (tcn1, always active) ----
        buf_ref[0:c_in, OFF:OFF + LB] = a.astype(buf_ref.dtype)
        win = buf_ref[0:c_in, OFF - padB:OFF + LB]       # (c_in, padB+LB), left-padded
        acc = _tap(w1_ref, 0, win, dB)
        for t in range(1, K):
            acc = acc + _tap(w1_ref, t, win, dB)
        h = jnp.maximum(acc + b1_ref[...], 0.0)
        # dropout: identity in eval mode.

        # ---- conv2: causal dilated conv (+ ReLU unless last block) ----
        buf_ref[0:c_out, OFF:OFF + LB] = h.astype(buf_ref.dtype)
        win2 = buf_ref[0:c_out, OFF - padB:OFF + LB]
        acc2 = _tap(w2_ref, 0, win2, dB)
        for t in range(1, K):
            acc2 = acc2 + _tap(w2_ref, t, win2, dB)
        acc2 = acc2 + b2_ref[...]
        if blk["active2"]:
            acc2 = jnp.maximum(acc2, 0.0)

        # ---- residual path ----
        if blk["has_ds"]:
            res = jnp.dot(wd_ref[...], a.astype(jnp.bfloat16),
                          preferred_element_type=jnp.float32) + bd_ref[...]
        else:
            res = a
        a = acc2 + res

    out_ref[0] = a.astype(out_ref.dtype)


def _to_lane_major(x, G):
    """(B, C, L) -> (G, C, L*Bg) with column index = l*Bg + b_local."""
    B, C, L = x.shape
    Bg = B // G
    return x.reshape(G, Bg, C, L).transpose(0, 2, 3, 1).reshape(G, C, L * Bg)


def _from_lane_major(y, B):
    """(G, C, L*Bg) -> (B, C, L)."""
    G, C, LBg = y.shape
    Bg = B // G
    L = LBg // Bg
    return y.reshape(G, C, L, Bg).transpose(0, 3, 1, 2).reshape(B, C, L)


def tcn_forward_pallas(x, blocks, *, target_cols=512):
    """x: (B, C_in, L) f32.  Runs the whole TCN in one fused pallas_call."""
    B, c0, L = x.shape

    # Batch grouping: keep the lane/column dim (L*Bg) >= target_cols when
    # possible; >1 group gives a "parallel" grid axis (v7x TensorCore sharding).
    G = 1
    for g in range(min(B, 8), 1, -1):
        if B % g == 0 and (B // g) * L >= target_cols:
            G = g
            break
    Bg = B // G
    LB = L * Bg

    x_lay = _to_lane_major(x, G)

    args = [x_lay]
    in_specs = [pl.BlockSpec((1, c0, LB), lambda g: (g, 0, 0))]
    meta = []
    max_padB = 0
    c_max = c0
    all_even = (c0 % 2 == 0)
    for p in blocks:
        K = p["kernel_size"]
        d = p["dilation"]
        c_out, c_in = p["w1"].shape[0], p["w1"].shape[1]
        w1t = jnp.transpose(p["w1"], (2, 0, 1)).astype(jnp.bfloat16)  # (K,c_out,c_in)
        w2t = jnp.transpose(p["w2"], (2, 0, 1)).astype(jnp.bfloat16)  # (K,c_out,c_out)
        args += [w1t, p["b1"][:, None], w2t, p["b2"][:, None]]
        in_specs += [
            pl.BlockSpec((K, c_out, c_in), lambda g: (0, 0, 0)),
            pl.BlockSpec((c_out, 1), lambda g: (0, 0)),
            pl.BlockSpec((K, c_out, c_out), lambda g: (0, 0, 0)),
            pl.BlockSpec((c_out, 1), lambda g: (0, 0)),
        ]
        if p["has_downsample"]:
            args += [p["wd"].astype(jnp.bfloat16), p["bd"][:, None]]
            in_specs += [
                pl.BlockSpec((c_out, c_in), lambda g: (0, 0)),
                pl.BlockSpec((c_out, 1), lambda g: (0, 0)),
            ]
        max_padB = max(max_padB, (K - 1) * d * Bg)
        c_max = max(c_max, c_in, c_out)
        all_even = all_even and (c_in % 2 == 0) and (c_out % 2 == 0)
        meta.append(dict(K=K, d=d, c_in=c_in, c_out=c_out,
                         has_ds=p["has_downsample"], active2=p["active2"]))

    c_last = meta[-1]["c_out"]
    # Lane-align the causal-pad offset so staging stores start on a 128-lane
    # boundary (the pad region just gets a few extra always-zero columns).
    OFF = _round_up(max_padB, 128) if max_padB > 0 else 0

    # bf16 staging: one cast per activation (instead of K per conv) and half
    # the staging traffic.  Fall back to f32 for odd channel counts so all
    # packed-sublane stores stay pair-aligned.
    stage_dtype = jnp.bfloat16 if all_even else jnp.float32
    stage_itemsize = 2 if stage_dtype == jnp.bfloat16 else 4

    # explicit VMEM budget (inputs double-buffered + output block + scratch)
    est = stage_itemsize * c_max * (OFF + LB) + 2 * 4 * c_last * LB
    for a_ in args:
        est += 2 * a_.size * a_.dtype.itemsize
    vmem_limit = int(min(100 * 1024 * 1024, max(4 * 1024 * 1024, 2 * est)))

    kernel = functools.partial(_tcn_fused_kernel, meta=meta, Bg=Bg, LB=LB,
                               OFF=OFF, c_max=c_max)
    y = pl.pallas_call(
        kernel,
        out_shape=jax.ShapeDtypeStruct((G, c_last, LB), jnp.float32),
        grid=(G,),
        in_specs=in_specs,
        out_specs=pl.BlockSpec((1, c_last, LB), lambda g: (g, 0, 0)),
        scratch_shapes=[pltpu.VMEM((c_max, OFF + LB), stage_dtype)],
        compiler_params=pltpu.CompilerParams(
            dimension_semantics=("parallel",),
            vmem_limit_bytes=vmem_limit),
    )(*args)
    return _from_lane_major(y, B)


# ----------------------------------------------------------------------------
# Parameter construction (deterministic; weight_norm folded into effective W)
# ----------------------------------------------------------------------------
def _weight_norm_conv_params(key, c_out, c_in, k):
    kv, kb = jax.random.split(key)
    v = 0.01 * jax.random.normal(kv, (c_out, c_in, k), jnp.float32)
    norm = jnp.sqrt(jnp.sum(v * v, axis=(1, 2), keepdims=True)) + 1e-12
    g = (0.5 + 0.05 * jnp.arange(c_out, dtype=jnp.float32))[:, None, None]
    w = g * v / norm                      # effective weight_norm weight (c_out,c_in,K)
    b = 0.01 * jax.random.normal(kb, (c_out,), jnp.float32)
    return w, b


def make_tcn_params(key, initial_channels, latent_channels, out_channels,
                    kernel_size, dilatation, nb_blocks):
    assert nb_blocks >= 2
    plan = [(initial_channels, latent_channels)]
    plan += [(latent_channels, latent_channels)] * (nb_blocks - 2)
    plan += [(latent_channels, out_channels)]
    keys = jax.random.split(key, nb_blocks)
    blocks = []
    for i, (c_in, c_out) in enumerate(plan):
        k1, k2, k3, k4 = jax.random.split(keys[i], 4)
        w1, b1 = _weight_norm_conv_params(k1, c_out, c_in, kernel_size)
        w2, b2 = _weight_norm_conv_params(k2, c_out, c_out, kernel_size)
        has_ds = c_in != c_out
        wd = 0.01 * jax.random.normal(k3, (c_out, c_in), jnp.float32) if has_ds else None
        bd = 0.01 * jax.random.normal(k4, (c_out,), jnp.float32) if has_ds else None
        blocks.append(dict(
            w1=w1, b1=b1, w2=w2, b2=b2, wd=wd, bd=bd,
            dilation=dilatation ** i, has_downsample=has_ds,
            active2=(i != nb_blocks - 1),      # last block: 2nd conv has no ReLU
            kernel_size=kernel_size))
    return blocks


def make_decoder_params(key, *, in_channels, out_channels, latent_dim,
                        kernel_size, stride, dilatation, nb_blocks,
                        upsamplenum, seq_len, labels_latent_dim):
    assert stride == 1, "residual add requires stride == 1"
    assert seq_len % upsamplenum == 0
    kd, kb, kt = jax.random.split(key, 3)
    d_in = latent_dim + labels_latent_dim
    d_out = in_channels * (seq_len // upsamplenum)
    w_dense = 0.1 * jax.random.normal(kd, (d_out, d_in), jnp.float32)
    b_dense = 0.1 * jax.random.normal(kb, (d_out,), jnp.float32)
    blocks = make_tcn_params(kt, in_channels, latent_dim, out_channels,
                             kernel_size, dilatation, nb_blocks)
    return dict(w_dense=w_dense, b_dense=b_dense, blocks=blocks,
                in_channels=in_channels, seq_len=seq_len,
                upsamplenum=upsamplenum)


# ----------------------------------------------------------------------------
# Full TCN_decoder forward (Pallas path)
# ----------------------------------------------------------------------------
def tcn_decoder_forward_pallas(x, labels, params):
    up = params["upsamplenum"]
    L = params["seq_len"]
    c0 = params["in_channels"]
    B = x.shape[0]
    h = dense_head_pallas(x, labels, params["w_dense"], params["b_dense"])
    h = h.reshape(B, c0, L // up)          # torch .view(b, -1, seq_len/up)
    h = jnp.repeat(h, up, axis=2)          # nn.Upsample(nearest) -- layout glue
    return tcn_forward_pallas(h, params["blocks"])


# ----------------------------------------------------------------------------
# Pure-JAX reference (same bf16-operand / f32-accumulate matmul convention)
# ----------------------------------------------------------------------------
def _causal_conv1d_ref(x, w, b, d):
    K = w.shape[-1]
    pad = (K - 1) * d
    xp = jnp.pad(x, ((0, 0), (0, 0), (pad, 0)))
    y = lax.conv_general_dilated(
        xp.astype(jnp.bfloat16), w.astype(jnp.bfloat16),
        window_strides=(1,), padding="VALID", rhs_dilation=(d,),
        dimension_numbers=("NCH", "OIH", "NCH"),
        preferred_element_type=jnp.float32)
    return y + b[None, :, None]


def tcn_forward_ref(x, blocks):
    for p in blocks:
        d = p["dilation"]
        out = jnp.maximum(_causal_conv1d_ref(x, p["w1"], p["b1"], d), 0.0)
        out = _causal_conv1d_ref(out, p["w2"], p["b2"], d)
        if p["active2"]:
            out = jnp.maximum(out, 0.0)
        if p["has_downsample"]:
            res = jnp.einsum("oc,bcl->bol",
                             p["wd"].astype(jnp.bfloat16),
                             x.astype(jnp.bfloat16),
                             preferred_element_type=jnp.float32)
            res = res + p["bd"][None, :, None]
        else:
            res = x
        x = out + res
    return x


def tcn_decoder_forward_ref(x, labels, params):
    zc = jnp.concatenate([x, labels], axis=1)
    wT = params["w_dense"].T.astype(jnp.bfloat16)
    h = jnp.dot(zc.astype(jnp.bfloat16), wT, preferred_element_type=jnp.float32)
    h = h + params["b_dense"][None, :]
    B = x.shape[0]
    c0, up, L = params["in_channels"], params["upsamplenum"], params["seq_len"]
    h = h.reshape(B, c0, L // up)
    h = jnp.repeat(h, up, axis=2)
    return tcn_forward_ref(h, params["blocks"])


# ----------------------------------------------------------------------------
if __name__ == "__main__":
    # small TCN_decoder config
    in_channels = 4          # decoder "in_channels" (TCN input channels)
    out_channels = 4         # decoder output channels
    latent_dim = 8           # also the TCN latent channel count
    labels_latent_dim = 4
    kernel_size = 3
    stride = 1               # only stride=1 is meaningful (residual add)
    dilatation = 2
    dropout = 0.1            # identity in eval mode
    nb_blocks = 3
    upsamplenum = 2
    seq_len = 16
    B = 2

    key = jax.random.PRNGKey(0)
    kx, kl, kp = jax.random.split(key, 3)
    x = jax.random.normal(kx, (B, latent_dim), jnp.float32)
    labels = jax.random.normal(kl, (B, labels_latent_dim), jnp.float32)

    params = make_decoder_params(
        kp, in_channels=in_channels, out_channels=out_channels,
        latent_dim=latent_dim, kernel_size=kernel_size, stride=stride,
        dilatation=dilatation, nb_blocks=nb_blocks, upsamplenum=upsamplenum,
        seq_len=seq_len, labels_latent_dim=labels_latent_dim)

    y = jax.block_until_ready(tcn_decoder_forward_pallas(x, labels, params))
    y_ref = jax.block_until_ready(tcn_decoder_forward_ref(x, labels, params))

    assert y.shape == (B, out_channels, seq_len), y.shape
    max_err = float(jnp.max(jnp.abs(y - y_ref)))
    assert jnp.allclose(y, y_ref, rtol=2e-2, atol=2e-3), max_err

    print("KERNEL_OK")
</pallas_src>

<mosaic_0001>
module attributes {stable_mosaic.version = 11 : i64} {
  func.func @_dense_head_kernel(%arg0: memref<2x8xf32, #tpu.memory_space<vmem>>, %arg1: memref<2x4xf32, #tpu.memory_space<vmem>>, %arg2: memref<8x32xbf16, #tpu.memory_space<vmem>>, %arg3: memref<4x32xbf16, #tpu.memory_space<vmem>>, %arg4: memref<1x32xf32, #tpu.memory_space<vmem>>, %arg5: memref<2x32xf32, #tpu.memory_space<vmem>>) attributes {dimension_semantics = [], scalar_prefetch = 0 : i64, scratch_operands = 0 : i64, tpu.core_type = #tpu.core_type<tc>} {
    %c0 = arith.constant 0 : index
    %c0_0 = arith.constant 0 : index
    %0 = vector.load %arg0[%c0, %c0_0] : memref<2x8xf32, #tpu.memory_space<vmem>>, vector<2x8xf32>
    %1 = arith.truncf %0 : vector<2x8xf32> to vector<2x8xbf16>
    %c0_1 = arith.constant 0 : index
    %c0_2 = arith.constant 0 : index
    %2 = vector.load %arg2[%c0_1, %c0_2] : memref<8x32xbf16, #tpu.memory_space<vmem>>, vector<8x32xbf16>
    %cst = arith.constant dense<0.000000e+00> : vector<2x32xf32>
    %3 = tpu.matmul %1, %2, %cst {dimension_numbers = #tpu.dot_dimension_numbers<[1], [0], [0], [1], [0, 0, 1, 1], [], []>} : vector<2x8xbf16>, vector<8x32xbf16>, vector<2x32xf32> -> vector<2x32xf32>
    %c0_3 = arith.constant 0 : index
    %c0_4 = arith.constant 0 : index
    %4 = vector.load %arg1[%c0_3, %c0_4] : memref<2x4xf32, #tpu.memory_space<vmem>>, vector<2x4xf32>
    %5 = arith.truncf %4 : vector<2x4xf32> to vector<2x4xbf16>
    %c0_5 = arith.constant 0 : index
    %c0_6 = arith.constant 0 : index
    %6 = vector.load %arg3[%c0_5, %c0_6] : memref<4x32xbf16, #tpu.memory_space<vmem>>, vector<4x32xbf16>
    %cst_7 = arith.constant dense<0.000000e+00> : vector<2x32xf32>
    %7 = tpu.matmul %5, %6, %cst_7 {dimension_numbers = #tpu.dot_dimension_numbers<[1], [0], [0], [1], [0, 0, 1, 1], [], []>} : vector<2x4xbf16>, vector<4x32xbf16>, vector<2x32xf32> -> vector<2x32xf32>
    %8 = arith.addf %3, %7 : vector<2x32xf32>
    %c0_8 = arith.constant 0 : index
    %c0_9 = arith.constant 0 : index
    %9 = vector.load %arg4[%c0_8, %c0_9] : memref<1x32xf32, #tpu.memory_space<vmem>>, vector<1x32xf32>
    %10 = vector.broadcast %9 : vector<1x32xf32> to vector<2x32xf32>
    %11 = arith.addf %8, %10 : vector<2x32xf32>
    %c0_10 = arith.constant 0 : index
    %c0_11 = arith.constant 0 : index
    %12 = vector.load %arg5[%c0_10, %c0_11] : memref<2x32xf32, #tpu.memory_space<vmem>>, vector<2x32xf32>
    tpu.vector_store %arg5[%c0_10, %c0_11], %11 {strides = array<i32>} : memref<2x32xf32, #tpu.memory_space<vmem>>, vector<2x32xf32>,
    return
  }
}

</mosaic_0001>

<llo_original>
// kernel: tpu_custom_call.1
$region0: #{tpu_custom_call.1}
  #allocation0 [shape = 'u32[]', space=smem, size = 0x4, offset = 0x4, fixed_abs, tag = 'smem constant byte address 0x4 - core index']
  #allocation1 [shape = 'u32[144,128]{1,0:T(1,128)}', space=vmem, size = 0x12000, scoped, tag = 'internal scratch']
  %s0 = inlined_call_operand.hbm [shape: f32[2,8], index: 0, kind: input, shape index: {}]
  %s1 = inlined_call_operand.vmem [shape: f32[2,4], index: 1, kind: input, shape index: {}]
  %s2 = inlined_call_operand.vmem [shape: bf16[8,32], index: 2, kind: input, shape index: {}]
  %s3 = inlined_call_operand.vmem [shape: bf16[4,32], index: 3, kind: input, shape index: {}]
  %s4 = inlined_call_operand.vmem [shape: f32[1,32], index: 4, kind: input, shape index: {}]
  %s5 = inlined_call_operand.hbm [shape: f32[2,32], index: 5, kind: output, shape index: {}]
  %s6 = sld [smem:[#allocation0]]
  $region34: #{tpu_custom_call.1} parent=0
    _
  %s8 = ssub.s32 1, %s6
  %s9 = scalar_select 0, %s8, %s6
  $region1: #{tpu_custom_call.1} parent=0
    #allocation2 [shape = 'u8[1024]{0}', space=vmem, size = 0x400, scoped, tag = 'input window, operand 0, single buffered']
    #allocation3 [shape = 's32[1]{0}', space=sflag, size = 0x4, scoped, tag = 'scoped memory for tpu_custom_call.1']
    #allocation4 [shape = 's32[1]{0}', space=sflag, size = 0x4, scoped, tag = 'scoped memory for tpu_custom_call.1']
    #allocation5 [shape = 'u8[1024]{0}', space=vmem, size = 0x400, scoped, tag = 'output window, operand 0, single buffered']
    %10 = vsyncpa [#allocation3], 0
    %11 = vsyncpa [#allocation4], 0
    // Predicated region
    $region2: #{tpu_custom_call.1} parent=1 // pred_check
      _
    $region3: #{tpu_custom_call.1} parent=1 // pred_check_branch
      %13 = sbr.rel (0) target = $region5
    $region4: #{tpu_custom_call.1} parent=1 // pred_region
      %s15 = ssub.s32 32, 32
      %16 = vsyncadd [#allocation3], %s15
      %s18 = sshll.u32 [#allocation2], 4
      %s19 = int_to_ptr.vmem [resolvable:$true] %s18
      %21 = dma.hbm_to_vmem [thread:$0]  %s0, 32, %s19, [#allocation3]
    $region5: #{tpu_custom_call.1} parent=1 // pred_fallthru
      _
    // Predicated region
    $region6: #{tpu_custom_call.1} parent=1 // pred_check
      _
    $region7: #{tpu_custom_call.1} parent=1 // pred_check_branch
      %23 = sbr.rel (0) target = $region9
    $region8: #{tpu_custom_call.1} parent=1 // pred_region
      _
    $region9: #{tpu_custom_call.1} parent=1 // pred_fallthru
      _
    // Predicated region
    $region10: #{tpu_custom_call.1} parent=1 // pred_check
      _
    $region11: #{tpu_custom_call.1} parent=1 // pred_check_branch
      %25 = sbr.rel (0) target = $region13
    $region12: #{tpu_custom_call.1} parent=1 // pred_region
      _
    $region13: #{tpu_custom_call.1} parent=1 // pred_fallthru
      _
    // Predicated region
    $region14: #{tpu_custom_call.1} parent=1 // pred_check
      _
    $region15: #{tpu_custom_call.1} parent=1 // pred_check_branch
      %27 = sbr.rel (0) target = $region17
    $region16: #{tpu_custom_call.1} parent=1 // pred_region
      _
    $region17: #{tpu_custom_call.1} parent=1 // pred_fallthru
      _
    // Predicated region
    $region18: #{tpu_custom_call.1} parent=1 // pred_check
      _
    $region19: #{tpu_custom_call.1} parent=1 // pred_check_branch
      %29 = sbr.rel (0) target = $region21
    $region20: #{tpu_custom_call.1} parent=1 // pred_region
      _
    $region21: #{tpu_custom_call.1} parent=1 // pred_fallthru
      _
    // Predicated region
    $region22: #{tpu_custom_call.1} parent=1 // pred_check
      _
    $region23: #{tpu_custom_call.1} parent=1 // pred_check_branch
      %31 = sbr.rel (0) target = $region25
    $region24: #{tpu_custom_call.1} parent=1 // pred_region
      %32 = dma.done [#allocation3], 32
    $region25: #{tpu_custom_call.1} parent=1 // pred_fallthru
      _
    %v34 = vld [vmem:[#allocation2] sm:$0x3]
    %v35 = vpack.c.bf16 %v34, %v34
    %v36 = vld [vmem:[%s2] sm:$0xf]
    %v37 = vld [vmem:[%s1] sm:$0x3]
    %v38 = vpack.c.bf16 %v37, %v37
    %v39 = vld [vmem:[%s3] sm:$0x3]
    %vm40 = vcmask 31744
    %v42 = vsel %vm40, %v38, 0
    %vm44 = vcmask 1041408
    %v46 = vsel %vm44, %v39, 0
    %48 = vmatprep.subr.bf16.mxu0 0
    %49 = vmatpush1.bf16.msra.mxu0 %v46
    %50 = vmatprep.subr.bf16.mxu0 0
    %51 = vmatpush1.bf16.msra.mxu0 0
    %52 = vmatprep.subr.bf16.mxu0 0
    %53 = vmatpush1.bf16.msra.mxu0 0
    %54 = vmatprep.subr.bf16.mxu0 0
    %55 = vmatpush1.bf16.msra.mxu0 0
    %56 = vmatprep.subr.bf16.mxu0 0
    %57 = vmatpush1.bf16.msra.mxu0 0
    %58 = vmatprep.subr.bf16.mxu0 0
    %59 = vmatpush1.bf16.msra.mxu0 0
    %60 = vmatprep.subr.bf16.mxu0 0
    %61 = vmatpush1.bf16.msra.mxu0 0
    %62 = vmatprep.subr.bf16.mxu0 0
    %63 = vmatpush1.bf16.msra.mxu0 0
    %64 = vmatprep.subr.bf16.mxu0 0
    %65 = vmatpush1.bf16.msra.mxu0 0
    %66 = vmatprep.subr.bf16.mxu0 0
    %67 = vmatpush1.bf16.msra.mxu0 0
    %68 = vmatprep.subr.bf16.mxu0 0
    %69 = vmatpush1.bf16.msra.mxu0 0
    %70 = vmatprep.subr.bf16.mxu0 0
    %71 = vmatpush1.bf16.msra.mxu0 0
    %72 = vmatprep.subr.bf16.mxu0 0
    %73 = vmatpush1.bf16.msra.mxu0 0
    %74 = vmatprep.subr.bf16.mxu0 0
    %75 = vmatpush1.bf16.msra.mxu0 0
    %76 = vmatprep.subr.bf16.mxu0 0
    %77 = vmatpush1.bf16.msra.mxu0 0
    %78 = vmatprep.subr.bf16.mxu0 0
    %79 = vmatpush1.bf16.msra.mxu0 0
    %80 = vmatprep.mubr.bf16.mxu0 0
    %81 = vmatmul.mubr.bf16.gmra.mrb[0].mxu0 %v42
    %v82 = vpop.f32.mrb[0].mxu0
    %v83 = vadd.f32 0.0, %v82
    %v84 = vpop.f32.mrb[0].mxu0
    %v85 = vpop.f32.mrb[0].mxu0
    %v86 = vpop.f32.mrb[0].mxu0
    %87 = vdwg.mxu0
    %vm88 = vcmask 64512
    %v90 = vsel %vm88, %v35, 0
    %vm92 = vcmask 1043456
    %v94 = vsel %vm92, %v36, 0
    %96 = vmatprep.subr.bf16.mxu0 0
    %97 = vmatpush1.bf16.msra.mxu0 %v94
    %98 = vmatprep.subr.bf16.mxu0 0
    %99 = vmatpush1.bf16.msra.mxu0 0
    %100 = vmatprep.subr.bf16.mxu0 0
    %101 = vmatpush1.bf16.msra.mxu0 0
    %102 = vmatprep.subr.bf16.mxu0 0
    %103 = vmatpush1.bf16.msra.mxu0 0
    %104 = vmatprep.subr.bf16.mxu0 0
    %105 = vmatpush1.bf16.msra.mxu0 0
    %106 = vmatprep.subr.bf16.mxu0 0
    %107 = vmatpush1.bf16.msra.mxu0 0
    %108 = vmatprep.subr.bf16.mxu0 0
    %109 = vmatpush1.bf16.msra.mxu0 0
    %110 = vmatprep.subr.bf16.mxu0 0
    %111 = vmatpush1.bf16.msra.mxu0 0
    %112 = vmatprep.subr.bf16.mxu0 0
    %113 = vmatpush1.bf16.msra.mxu0 0
    %114 = vmatprep.subr.bf16.mxu0 0
    %115 = vmatpush1.bf16.msra.mxu0 0
    %116 = vmatprep.subr.bf16.mxu0 0
    %117 = vmatpush1.bf16.msra.mxu0 0
    %118 = vmatprep.subr.bf16.mxu0 0
    %119 = vmatpush1.bf16.msra.mxu0 0
    %120 = vmatprep.subr.bf16.mxu0 0
    %121 = vmatpush1.bf16.msra.mxu0 0
    %122 = vmatprep.subr.bf16.mxu0 0
    %123 = vmatpush1.bf16.msra.mxu0 0
    %124 = vmatprep.subr.bf16.mxu0 0
    %125 = vmatpush1.bf16.msra.mxu0 0
    %126 = vmatprep.subr.bf16.mxu0 0
    %127 = vmatpush1.bf16.msra.mxu0 0
    %128 = vmatprep.mubr.bf16.mxu0 0
    %129 = vmatmul.mubr.bf16.gmra.mrb[0].mxu0 %v90
    %v130 = vpop.f32.mrb[0].mxu0
    %v131 = vadd.f32 %v83, %v130
    %v132 = vpop.f32.mrb[0].mxu0
    %v133 = vpop.f32.mrb[0].mxu0
    %v134 = vpop.f32.mrb[0].mxu0
    %135 = vdwg.mxu0
    %v136 = vld [vmem:[%s4] sm:$0x1]
    %v138 = vlaneseq
    %v139 = vshrl.u32 %v138, 7
    %v140 = vsub.s32 0, %v139
    %v141 = vrot.slane %v136, %v140
    %v143 = vadd.f32 %v131, %v141
    %vm144 = vcmask 254976
    %145 = vst.msk [vmem:[#allocation5] sm:$0x3] %vm144, %v143
    // Predicated region
    $region26: #{tpu_custom_call.1} parent=1 // pred_check
      _
    $region27: #{tpu_custom_call.1} parent=1 // pred_check_branch
      %147 = sbr.rel (0) target = $region29
    $region28: #{tpu_custom_call.1} parent=1 // pred_region
      %s149 = ssub.s32 32, 32
      %150 = vsyncadd [#allocation4], %s149
      %s152 = sshll.u32 [#allocation5], 4
      %s153 = int_to_ptr.vmem [resolvable:$true] %s152
      %155 = dma.vmem_to_hbm [thread:$0]  %s153, 32, %s5, [#allocation4]
    $region29: #{tpu_custom_call.1} parent=1 // pred_fallthru
      _
    // Predicated region
    $region30: #{tpu_custom_call.1} parent=1 // pred_check
      _
    $region31: #{tpu_custom_call.1} parent=1 // pred_check_branch
      %157 = sbr.rel (0) target = $region33
    $region32: #{tpu_custom_call.1} parent=1 // pred_region
      %158 = dma.done [#allocation4], 32
    $region33: #{tpu_custom_call.1} parent=1 // pred_fallthru
      _
    %159 = vsyncpa [#allocation3], 1
    %160 = vsyncpa [#allocation4], 1

</llo_original>
